<compile_context>
chip_gen: v6e
topology: v6e:2x2x1
jax: 0.10.0
libtpu: 0.0.40
codegen_flags: <defaults>
</compile_context>

<pallas_src>
import functools

import jax
import jax.numpy as jnp
from jax.experimental import pallas as pl
from jax.experimental.pallas import tpu as pltpu


def _round_up(n: int, m: int) -> int:
    return ((n + m - 1) // m) * m


def _rbf_kernel(x_ref, ct_ref, csq_ref, w12_ref, b12_ref, o_ref,
                *, mm_dtype, out_features):
    """One batch tile of the RBF forward.

    x_ref   : (TB, D)   f32      input rows for this grid step
    ct_ref  : (D,  Rp)  mm_dtype (-2 * centres)^T, lane dim = RBF features
    csq_ref : (1,  Rp)  f32      ||centre_r||^2 (from mm_dtype-rounded centres)
    w12_ref : (Rp, Op)  mm_dtype fused weight  ((sw.w*exp(-sig)).T @ lin.w.T)
    b12_ref : (1,  Op)  f32      fused bias    (sw.b @ lin.w.T + lin.b)
    o_ref   : (TB, O)   f32      output tile (un-padded O lanes)
    """
    x_mm = x_ref[...].astype(mm_dtype)                          # (TB, D)
    # ||x||^2 from the same rounded values used in the cross term -> the Gram
    # identity stays self-consistent (fewer negative-sq clamps in bf16).
    x_f = x_mm.astype(jnp.float32)
    x_sq = jnp.sum(x_f * x_f, axis=-1, keepdims=True)           # (TB, 1)

    # ||x - c||^2 = ||x||^2 + ||c||^2 - 2 x.c^T ; the -2 is folded into ct.
    xc = jnp.dot(x_mm, ct_ref[...],
                 preferred_element_type=jnp.float32)            # (TB, Rp)
    sq = jnp.maximum(x_sq + csq_ref[...] + xc, 0.0)             # clamp fp cancellation
    dist = jnp.sqrt(sq)                                         # (TB, Rp) f32

    # Fused (sw -> linear) layer: single matmul + bias.
    out = jnp.dot(dist.astype(mm_dtype), w12_ref[...],
                  preferred_element_type=jnp.float32) + b12_ref[...]   # (TB, Op)

    # Store only the real output columns (masked store; store slot has slack).
    o_ref[...] = out[:, :out_features].astype(o_ref.dtype)


def rbf_forward(x, centres, sigmas, sw_w, sw_b, lin_w, lin_b, *,
                block_b=2048, matmul_dtype=jnp.bfloat16, lane=128,
                pipeline_depth=None):
    """Pallas TPU forward of the RBF module.

    block_b: max batch rows per grid step.  Large tiles (~2048) amortize the
             per-grid-step overhead; the tile is additionally capped so the
             grid has >= 2 steps whenever B > 8 (lets v7x's two TensorCores
             split the batch via the "parallel" axis).  The working set is a
             few MB, comfortably inside every generation's VMEM.
    matmul_dtype: MXU operand dtype (f32 accumulation either way).  bf16 is
             the default: same effective multiply precision on TPU, half the
             parameter VMEM/DMA bytes.  Element-wise math stays f32
             (v5e-friendly).
    pipeline_depth: optional int; if set, requests pl.Buffered(n) pipelining
             on the streamed x/out specs (use if a trace shows exposed DMA).
    """
    B, D = x.shape
    R = centres.shape[0]
    O = lin_w.shape[0]
    f32 = jnp.float32

    # ---- host-side, one-time parameter prep (all O(R^2)) --------------------
    e = jnp.exp(-sigmas.astype(f32))                       # (R,)
    w1 = (sw_w.astype(f32) * e[None, :]).T                 # (R, R) sigma folded + pre-T
    w2 = lin_w.astype(f32).T                               # (R, O) pre-T
    # Fuse the two linear layers (no nonlinearity in between).
    w12 = w1 @ w2                                          # (R, O)
    b12 = sw_b.astype(f32) @ w2 + lin_b.astype(f32)        # (O,)

    # Round centres to the matmul dtype once, then derive BOTH the cross-term
    # operand and ||c||^2 from those values (self-consistent Gram identity).
    c_q = centres.astype(matmul_dtype).astype(f32)         # (R, D)
    ct = (-2.0 * c_q).T                                    # (D, R)  (-2 folded in; exact)
    c_sq = jnp.sum(c_q * c_q, axis=-1)[None, :]            # (1, R)

    # Zero-pad feature axes to full 128-lane vregs (lane-dense matmuls).
    Rp = _round_up(R, lane)
    Op = _round_up(O, lane)

    def pad2(a, rows, cols, dtype):
        return jnp.pad(a, ((0, rows - a.shape[0]),
                           (0, cols - a.shape[1]))).astype(dtype)

    ct_p = pad2(ct, D, Rp, matmul_dtype)                   # (D,  Rp)
    csq_p = pad2(c_sq, 1, Rp, f32)                         # (1,  Rp)
    w12_p = pad2(w12, Rp, Op, matmul_dtype)                # (Rp, Op)
    b12_p = pad2(b12[None, :], 1, Op, f32)                 # (1,  Op)

    # ---- batch tiling --------------------------------------------------------
    tb_cap = min(block_b, _round_up(B, 8))
    # >= 2 grid steps when possible so the parallel axis has work to split.
    n_steps = max(2 if B > 8 else 1, -(-B // tb_cap))
    tb = _round_up(-(-B // n_steps), 8)                    # sublane-aligned tile
    Bp = _round_up(B, tb)
    x_p = x.astype(f32)
    if Bp != B:
        x_p = jnp.pad(x_p, ((0, Bp - B), (0, 0)))          # padded rows are inert

    kernel = functools.partial(_rbf_kernel, mm_dtype=matmul_dtype,
                               out_features=O)

    def stream_spec(shape):
        if pipeline_depth is None:
            return pl.BlockSpec(shape, lambda i: (i, 0))
        return pl.BlockSpec(shape, lambda i: (i, 0),
                            pipeline_mode=pl.Buffered(pipeline_depth))

    def param_spec(shape):
        return pl.BlockSpec(shape, lambda i: (0, 0))       # VMEM-resident constant block

    out_p = pl.pallas_call(
        kernel,
        out_shape=jax.ShapeDtypeStruct((Bp, O), f32),      # un-padded O columns in HBM
        grid_spec=pl.GridSpec(
            grid=(Bp // tb,),
            in_specs=[
                stream_spec((tb, D)),                      # x: streamed per batch tile
                param_spec((D, Rp)),                       # (-2*centres)^T
                param_spec((1, Rp)),                       # ||c||^2
                param_spec((Rp, Op)),                      # fused weight
                param_spec((1, Op)),                       # fused bias
            ],
            out_specs=stream_spec((tb, O)),
        ),
        compiler_params=pltpu.CompilerParams(
            dimension_semantics=("parallel",),             # megacore / v7x 2-TC split
            vmem_limit_bytes=32 * 1024 * 1024,             # safe on v5e/v6e/v7x
        ),
    )(x_p, ct_p, csq_p, w12_p, b12_p)

    return out_p if Bp == B else out_p[:B]


def rbf_reference(x, centres, sigmas, sw_w, sw_b, lin_w, lin_b):
    # Pure-JAX reference mirroring the PyTorch forward exactly.
    diff = x[:, None, :] - centres[None, :, :]
    l2 = jnp.sqrt(jnp.sum(diff ** 2, axis=-1))
    distances = l2 / jnp.exp(sigmas)[None, :]
    h = distances @ sw_w.T + sw_b
    return h @ lin_w.T + lin_b


if __name__ == "__main__":
    # Small shapes consistent with the module.
    B, in_features, rbf_features, out_features = 64, 16, 32, 8

    key = jax.random.PRNGKey(0)
    k_x, k_c, k_sig, k_sww, k_swb, k_lw, k_lb = jax.random.split(key, 7)

    x = jax.random.normal(k_x, (B, in_features), jnp.float32)
    centres = jax.random.normal(k_c, (rbf_features, in_features), jnp.float32)
    # reset_parameters() initializes sigmas to 0; use small non-zero values so
    # the folded exp(-sigma) path is actually exercised.
    sigmas = 0.1 * jax.random.normal(k_sig, (rbf_features,), jnp.float32)
    sw_w = 0.1 * jax.random.normal(k_sww, (rbf_features, rbf_features), jnp.float32)
    sw_b = 0.1 * jax.random.normal(k_swb, (rbf_features,), jnp.float32)
    lin_w = 0.1 * jax.random.normal(k_lw, (out_features, rbf_features), jnp.float32)
    lin_b = 0.1 * jax.random.normal(k_lb, (out_features,), jnp.float32)

    ref = rbf_reference(x, centres, sigmas, sw_w, sw_b, lin_w, lin_b)

    # Default config (bf16 operands, large-tile path capped to a 2-step grid).
    out_default = jax.block_until_ready(
        rbf_forward(x, centres, sigmas, sw_w, sw_b, lin_w, lin_b))
    # Explicit f32 operands and a small tile -> grid=(4,): exercises the
    # batch-tiled, double-buffered path.
    out_f32 = jax.block_until_ready(
        rbf_forward(x, centres, sigmas, sw_w, sw_b, lin_w, lin_b,
                    block_b=16, matmul_dtype=jnp.float32))

    assert out_default.shape == (B, out_features)
    assert out_f32.shape == (B, out_features)
    assert bool(jnp.all(jnp.isfinite(out_default)))
    assert bool(jnp.all(jnp.isfinite(out_f32)))

    # Tolerances: the kernel computes the distance on the MXU (Gram identity)
    # and fuses the two linear layers, while the reference computes distances
    # element-wise on the VPU and applies the layers separately; TPU matmuls
    # multiply at bf16 granularity under default precision, so agreement is at
    # the ~1e-2 level of the O(10)-magnitude intermediates, not f32 epsilon.
    assert jnp.allclose(out_f32, ref, atol=2e-1, rtol=5e-2), "f32 path mismatch vs reference"
    assert jnp.allclose(out_default, ref, atol=3e-1, rtol=5e-2), "bf16 path mismatch vs reference"

    print("KERNEL_OK")
</pallas_src>

<mosaic_0001>
module attributes {stable_mosaic.version = 11 : i64} {
  func.func @_rbf_kernel(%arg0: i32, %arg1: memref<32x16xf32, #tpu.memory_space<vmem>>, %arg2: memref<16x128xbf16, #tpu.memory_space<vmem>>, %arg3: memref<1x128xf32, #tpu.memory_space<vmem>>, %arg4: memref<128x128xbf16, #tpu.memory_space<vmem>>, %arg5: memref<1x128xf32, #tpu.memory_space<vmem>>, %arg6: memref<32x8xf32, #tpu.memory_space<vmem>>) attributes {dimension_semantics = [#tpu.dimension_semantics<parallel>], iteration_bounds = array<i64: 2>, scalar_prefetch = 0 : i64, scratch_operands = 0 : i64, tpu.core_type = #tpu.core_type<tc>, window_params = [{transform_indices = @transform_0, window_bounds = array<i64: 32, 16>}, {pipeline_mode = #tpu.pipeline_mode<synchronous>, transform_indices = @transform_1, window_bounds = array<i64: 16, 128>}, {pipeline_mode = #tpu.pipeline_mode<synchronous>, transform_indices = @transform_2, window_bounds = array<i64: 1, 128>}, {pipeline_mode = #tpu.pipeline_mode<synchronous>, transform_indices = @transform_3, window_bounds = array<i64: 128, 128>}, {pipeline_mode = #tpu.pipeline_mode<synchronous>, transform_indices = @transform_4, window_bounds = array<i64: 1, 128>}, {transform_indices = @transform_5, window_bounds = array<i64: 32, 8>}]} {
    %c0 = arith.constant 0 : index
    %c0_0 = arith.constant 0 : index
    %0 = vector.load %arg1[%c0, %c0_0] : memref<32x16xf32, #tpu.memory_space<vmem>>, vector<32x16xf32>
    %1 = arith.truncf %0 : vector<32x16xf32> to vector<32x16xbf16>
    %2 = arith.extf %1 : vector<32x16xbf16> to vector<32x16xf32>
    %3 = arith.mulf %2, %2 : vector<32x16xf32>
    %cst = arith.constant dense<0.000000e+00> : vector<32xf32>
    %4 = vector.multi_reduction <add>, %3, %cst [1] : vector<32x16xf32> to vector<32xf32>
    %5 = vector.shape_cast %4 : vector<32xf32> to vector<32x1xf32>
    %c0_1 = arith.constant 0 : index
    %c0_2 = arith.constant 0 : index
    %6 = vector.load %arg2[%c0_1, %c0_2] : memref<16x128xbf16, #tpu.memory_space<vmem>>, vector<16x128xbf16>
    %cst_3 = arith.constant dense<0.000000e+00> : vector<32x128xf32>
    %7 = tpu.matmul %1, %6, %cst_3 {dimension_numbers = #tpu.dot_dimension_numbers<[1], [0], [0], [1], [0, 0, 1, 1], [], []>} : vector<32x16xbf16>, vector<16x128xbf16>, vector<32x128xf32> -> vector<32x128xf32>
    %c0_4 = arith.constant 0 : index
    %c0_5 = arith.constant 0 : index
    %8 = vector.load %arg3[%c0_4, %c0_5] : memref<1x128xf32, #tpu.memory_space<vmem>>, vector<1x128xf32>
    %9 = vector.broadcast %5 : vector<32x1xf32> to vector<32x128xf32>
    %10 = vector.broadcast %8 : vector<1x128xf32> to vector<32x128xf32>
    %11 = arith.addf %9, %10 : vector<32x128xf32>
    %12 = arith.addf %11, %7 : vector<32x128xf32>
    %cst_6 = arith.constant 0.000000e+00 : f32
    %13 = vector.broadcast %cst_6 : f32 to vector<32x128xf32>
    %14 = arith.maximumf %12, %13 : vector<32x128xf32>
    %15 = math.sqrt %14 : vector<32x128xf32>
    %16 = arith.truncf %15 : vector<32x128xf32> to vector<32x128xbf16>
    %c0_7 = arith.constant 0 : index
    %c0_8 = arith.constant 0 : index
    %17 = vector.load %arg4[%c0_7, %c0_8] : memref<128x128xbf16, #tpu.memory_space<vmem>>, vector<128x128xbf16>
    %cst_9 = arith.constant dense<0.000000e+00> : vector<32x128xf32>
    %18 = tpu.matmul %16, %17, %cst_9 {dimension_numbers = #tpu.dot_dimension_numbers<[1], [0], [0], [1], [0, 0, 1, 1], [], []>} : vector<32x128xbf16>, vector<128x128xbf16>, vector<32x128xf32> -> vector<32x128xf32>
    %c0_10 = arith.constant 0 : index
    %c0_11 = arith.constant 0 : index
    %19 = vector.load %arg5[%c0_10, %c0_11] : memref<1x128xf32, #tpu.memory_space<vmem>>, vector<1x128xf32>
    %20 = vector.broadcast %19 : vector<1x128xf32> to vector<32x128xf32>
    %21 = arith.addf %18, %20 : vector<32x128xf32>
    %22 = vector.extract_strided_slice %21 {offsets = [0, 0], sizes = [32, 8], strides = [1, 1]} : vector<32x128xf32> to vector<32x8xf32>
    %c0_12 = arith.constant 0 : index
    %c0_13 = arith.constant 0 : index
    %23 = vector.load %arg6[%c0_12, %c0_13] : memref<32x8xf32, #tpu.memory_space<vmem>>, vector<32x8xf32>
    tpu.vector_store %arg6[%c0_12, %c0_13], %22 {strides = array<i32>} : memref<32x8xf32, #tpu.memory_space<vmem>>, vector<32x8xf32>,
    return
  }
  func.func @transform_0(%arg0: i32) -> (i32, i32) {
    %c0_i32 = arith.constant 0 : i32
    %c0_i32_0 = arith.constant 0 : i32
    return %arg0, %c0_i32 : i32, i32
  }
  func.func @transform_1(%arg0: i32) -> (i32, i32) {
    %c0_i32 = arith.constant 0 : i32
    %c0_i32_0 = arith.constant 0 : i32
    %c0_i32_1 = arith.constant 0 : i32
    return %c0_i32, %c0_i32_0 : i32, i32
  }
  func.func @transform_2(%arg0: i32) -> (i32, i32) {
    %c0_i32 = arith.constant 0 : i32
    %c0_i32_0 = arith.constant 0 : i32
    %c0_i32_1 = arith.constant 0 : i32
    return %c0_i32, %c0_i32_0 : i32, i32
  }
  func.func @transform_3(%arg0: i32) -> (i32, i32) {
    %c0_i32 = arith.constant 0 : i32
    %c0_i32_0 = arith.constant 0 : i32
    %c0_i32_1 = arith.constant 0 : i32
    return %c0_i32, %c0_i32_0 : i32, i32
  }
  func.func @transform_4(%arg0: i32) -> (i32, i32) {
    %c0_i32 = arith.constant 0 : i32
    %c0_i32_0 = arith.constant 0 : i32
    %c0_i32_1 = arith.constant 0 : i32
    return %c0_i32, %c0_i32_0 : i32, i32
  }
  func.func @transform_5(%arg0: i32) -> (i32, i32) {
    %c0_i32 = arith.constant 0 : i32
    %c0_i32_0 = arith.constant 0 : i32
    return %arg0, %c0_i32 : i32, i32
  }
}

</mosaic_0001>

<llo_original>
// kernel: tpu_custom_call.1
$region0: #{tpu_custom_call.1}
  #allocation0 [shape = 'u32[]', space=smem, size = 0x4, offset = 0x4, fixed_abs, tag = 'smem constant byte address 0x4 - core index']
  #allocation1 [shape = 'u32[144,128]{1,0:T(1,128)}', space=vmem, size = 0x12000, scoped, tag = 'internal scratch']
  %s0 = inlined_call_operand.vmem [shape: f32[64,16], index: 0, kind: input, shape index: {}]
  %s1 = inlined_call_operand.vmem [shape: bf16[16,128], index: 1, kind: input, shape index: {}]
  %s2 = inlined_call_operand.vmem [shape: f32[1,128], index: 2, kind: input, shape index: {}]
  %s3 = inlined_call_operand.vmem [shape: bf16[128,128], index: 3, kind: input, shape index: {}]
  %s4 = inlined_call_operand.vmem [shape: f32[1,128], index: 4, kind: input, shape index: {}]
  %s5 = inlined_call_operand.vmem [shape: f32[64,8], index: 5, kind: output, shape index: {}]
  %s6 = sld [smem:[#allocation0]]
  $region53: #{tpu_custom_call.1} parent=0
    _
  %s8 = ssub.s32 1, %s6
  %s9 = scalar_select 0, %s8, %s6
  loop: start=0, step=1, limit=4
  $region2: #{tpu_custom_call.1} parent=0 // loop_pre_header
    _
  $region3: #{tpu_custom_call.1} parent=0 // loop_header
    %s11 = sphi 0, %s15
    %p12 = scmp.ge.s32.totalorder %s11, 4
    %s21 = sphi 0, %s23
    %s24 = sphi 0, %s21
    %s25 = sphi 0, %s24
    %s41 = sphi 0, %s25
    %s45 = sphi 0, %s45
    %s47 = sphi 0, %s45
    %s48 = sphi 0, %s47
    %s62 = sphi 0, %s48
    %s66 = sphi 0, %s66
    %s68 = sphi 0, %s66
    %s69 = sphi 0, %s68
    %s83 = sphi 0, %s69
    %s87 = sphi 0, %s87
    %s89 = sphi 0, %s87
    %s90 = sphi 0, %s89
    %s104 = sphi 0, %s90
    %s108 = sphi 0, %s108
    %s110 = sphi 0, %s108
    %s111 = sphi 0, %s110
    %s125 = sphi 0, %s111
    %s131 = sphi 0, %s133
    %s134 = sphi 0, %s131
    %s135 = sphi 0, %s134
    %s151 = sphi 0, %s135
  $region4: #{tpu_custom_call.1} parent=0 // loop_header_branch
    %14 = sbr.rel (%p12) target = $region8
  $region5: #{tpu_custom_call.1} parent=0 // loop_body
    %s16 = ssub.s32 %s11, 1
    %s17 = ssub.s32 %s11, 2
    %s18 = sadd.s32 %s11, 1
    %s19 = ssub.s32 %s11, %s18
    %p20 = scmp.eq.s32.totalorder %s19, 0
    %s22 = sadd.s32 %s21, 1
    %s23 = scalar_select %p20, %s21, %s22
    %p26 = pneg %p20
    %p27 = scmp.eq.s32.totalorder %s11, 1
    %p28 = por %p26, %p27
    %p29 = scmp.ne.s32.totalorder %s21, %s24
    %p30 = scmp.eq.s32.totalorder %s11, 0
    %p31 = por %p29, %p30
    %p32 = scmp.ne.s32.totalorder %s21, %s24
    %p33 = scmp.eq.s32.totalorder %s16, 1
    %p34 = por %p32, %p33
    %p35 = scmp.ne.s32.totalorder %s24, %s25
    %p36 = scmp.eq.s32.totalorder %s16, 0
    %p37 = por %p35, %p36
    %p38 = scmp.ne.s32.totalorder %s24, %s25
    %p39 = scmp.eq.s32.totalorder %s17, 1
    %p40 = por %p38, %p39
    %p42 = scmp.ne.s32.totalorder %s25, %s41
    %p43 = scmp.eq.s32.totalorder %s17, 0
    %p44 = por %p42, %p43
    %s46 = sadd.s32 %s45, 1
    %p49 = scmp.eq.s32.totalorder %s11, 1
    %p50 = scmp.ne.s32.totalorder %s45, %s47
    %p51 = scmp.eq.s32.totalorder %s11, 0
    %p52 = por %p50, %p51
    %p53 = scmp.ne.s32.totalorder %s45, %s47
    %p54 = scmp.eq.s32.totalorder %s16, 1
    %p55 = por %p53, %p54
    %p56 = scmp.ne.s32.totalorder %s47, %s48
    %p57 = scmp.eq.s32.totalorder %s16, 0
    %p58 = por %p56, %p57
    %p59 = scmp.ne.s32.totalorder %s47, %s48
    %p60 = scmp.eq.s32.totalorder %s17, 1
    %p61 = por %p59, %p60
    %p63 = scmp.ne.s32.totalorder %s48, %s62
    %p64 = scmp.eq.s32.totalorder %s17, 0
    %p65 = por %p63, %p64
    %s67 = sadd.s32 %s66, 1
    %p70 = scmp.eq.s32.totalorder %s11, 1
    %p71 = scmp.ne.s32.totalorder %s66, %s68
    %p72 = scmp.eq.s32.totalorder %s11, 0
    %p73 = por %p71, %p72
    %p74 = scmp.ne.s32.totalorder %s66, %s68
    %p75 = scmp.eq.s32.totalorder %s16, 1
    %p76 = por %p74, %p75
    %p77 = scmp.ne.s32.totalorder %s68, %s69
    %p78 = scmp.eq.s32.totalorder %s16, 0
    %p79 = por %p77, %p78
    %p80 = scmp.ne.s32.totalorder %s68, %s69
    %p81 = scmp.eq.s32.totalorder %s17, 1
    %p82 = por %p80, %p81
    %p84 = scmp.ne.s32.totalorder %s69, %s83
    %p85 = scmp.eq.s32.totalorder %s17, 0
    %p86 = por %p84, %p85
    %s88 = sadd.s32 %s87, 1
    %p91 = scmp.eq.s32.totalorder %s11, 1
    %p92 = scmp.ne.s32.totalorder %s87, %s89
    %p93 = scmp.eq.s32.totalorder %s11, 0
    %p94 = por %p92, %p93
    %p95 = scmp.ne.s32.totalorder %s87, %s89
    %p96 = scmp.eq.s32.totalorder %s16, 1
    %p97 = por %p95, %p96
    %p98 = scmp.ne.s32.totalorder %s89, %s90
    %p99 = scmp.eq.s32.totalorder %s16, 0
    %p100 = por %p98, %p99
    %p101 = scmp.ne.s32.totalorder %s89, %s90
    %p102 = scmp.eq.s32.totalorder %s17, 1
    %p103 = por %p101, %p102
    %p105 = scmp.ne.s32.totalorder %s90, %s104
    %p106 = scmp.eq.s32.totalorder %s17, 0
    %p107 = por %p105, %p106
    %s109 = sadd.s32 %s108, 1
    %p112 = scmp.eq.s32.totalorder %s11, 1
    %p113 = scmp.ne.s32.totalorder %s108, %s110
    %p114 = scmp.eq.s32.totalorder %s11, 0
    %p115 = por %p113, %p114
    %p116 = scmp.ne.s32.totalorder %s108, %s110
    %p117 = scmp.eq.s32.totalorder %s16, 1
    %p118 = por %p116, %p117
    %p119 = scmp.ne.s32.totalorder %s110, %s111
    %p120 = scmp.eq.s32.totalorder %s16, 0
    %p121 = por %p119, %p120
    %p122 = scmp.ne.s32.totalorder %s110, %s111
    %p123 = scmp.eq.s32.totalorder %s17, 1
    %p124 = por %p122, %p123
    %p126 = scmp.ne.s32.totalorder %s111, %s125
    %p127 = scmp.eq.s32.totalorder %s17, 0
    %p128 = por %p126, %p127
    %s129 = ssub.s32 %s11, %s18
    %p130 = scmp.eq.s32.totalorder %s129, 0
    %s132 = sadd.s32 %s131, 1
    %s133 = scalar_select %p130, %s131, %s132
    %p136 = pneg %p130
    %p137 = scmp.eq.s32.totalorder %s11, 1
    %p138 = por %p136, %p137
    %p139 = scmp.ne.s32.totalorder %s131, %s134
    %p140 = scmp.eq.s32.totalorder %s11, 0
    %p141 = por %p139, %p140
    %p142 = scmp.ne.s32.totalorder %s131, %s134
    %p143 = scmp.eq.s32.totalorder %s16, 1
    %p144 = por %p142, %p143
    %p145 = scmp.ne.s32.totalorder %s134, %s135
    %p146 = scmp.eq.s32.totalorder %s16, 0
    %p147 = por %p145, %p146
    %p148 = scmp.ne.s32.totalorder %s134, %s135
    %p149 = scmp.eq.s32.totalorder %s17, 1
    %p150 = por %p148, %p149
    %p152 = scmp.ne.s32.totalorder %s135, %s151
    %p153 = scmp.eq.s32.totalorder %s17, 0
    %p154 = por %p152, %p153
    %p155 = scmp.le.s32.totalorder 1, %s11
    %p156 = scmp.lt.s32.totalorder %s11, 3
    %p157 = pnand %p155, %p156
    %p158 = pneg %p157
    // Predicated region
    $region9: #{tpu_custom_call.1} parent=5 // pred_check
      _
    $region10: #{tpu_custom_call.1} parent=5 // pred_check_branch
      %160 = sbr.rel (%p157) target = $region12
    $region11: #{tpu_custom_call.1} parent=5 // pred_region
      %s161 = ssub.s32 %s11, 1
      // Predicated region
      $region13: #{tpu_custom_call.1} parent=11 // pred_check
        %p162 = pneg %p58
      $region14: #{tpu_custom_call.1} parent=11 // pred_check_branch
        %164 = sbr.rel (%p162) target = $region16
      $region15: #{tpu_custom_call.1} parent=11 // pred_region
        _
      $region16: #{tpu_custom_call.1} parent=11 // pred_fallthru
        _
      // Predicated region
      $region17: #{tpu_custom_call.1} parent=11 // pred_check
        %p165 = pneg %p79
      $region18: #{tpu_custom_call.1} parent=11 // pred_check_branch
        %167 = sbr.rel (%p165) target = $region20
      $region19: #{tpu_custom_call.1} parent=11 // pred_region
        _
      $region20: #{tpu_custom_call.1} parent=11 // pred_fallthru
        _
      // Predicated region
      $region21: #{tpu_custom_call.1} parent=11 // pred_check
        %p168 = pneg %p100
      $region22: #{tpu_custom_call.1} parent=11 // pred_check_branch
        %170 = sbr.rel (%p168) target = $region24
      $region23: #{tpu_custom_call.1} parent=11 // pred_region
        _
      $region24: #{tpu_custom_call.1} parent=11 // pred_fallthru
        _
      // Predicated region
      $region25: #{tpu_custom_call.1} parent=11 // pred_check
        %p171 = pneg %p121
      $region26: #{tpu_custom_call.1} parent=11 // pred_check_branch
        %173 = sbr.rel (%p171) target = $region28
      $region27: #{tpu_custom_call.1} parent=11 // pred_region
        _
      $region28: #{tpu_custom_call.1} parent=11 // pred_fallthru
        _
    $region12: #{tpu_custom_call.1} parent=5 // pred_fallthru
      _
    %p174 = scmp.lt.s32.totalorder %s11, 2
    // Predicated region
    $region29: #{tpu_custom_call.1} parent=5 // pred_check
      %p175 = pneg %p174
    $region30: #{tpu_custom_call.1} parent=5 // pred_check_branch
      %177 = sbr.rel (%p175) target = $region32
    $region31: #{tpu_custom_call.1} parent=5 // pred_region
      // Predicated region
      $region33: #{tpu_custom_call.1} parent=31 // pred_check
        %p178 = pneg %p31
      $region34: #{tpu_custom_call.1} parent=31 // pred_check_branch
        %180 = sbr.rel (%p178) target = $region36
      $region35: #{tpu_custom_call.1} parent=31 // pred_region
        %s181 = smul.u32 4, %s11
        %p182 = scmp.lt.s32.totalorder %s181, 7
        %s183 = scalar_select %p182, %s181, 7
        %s184 = smul.addr %s183, 8
        %s185 = scalar_lea.vmem %s0, %s184
        %s186 = smul.u32 4, %s11
      $region36: #{tpu_custom_call.1} parent=31 // pred_fallthru
        _
    $region32: #{tpu_custom_call.1} parent=5 // pred_fallthru
      _
    %p187 = scmp.le.s32.totalorder 1, %s11
    %p188 = scmp.lt.s32.totalorder %s11, 3
    %p189 = pnand %p187, %p188
    %p190 = pneg %p189
    // Predicated region
    $region37: #{tpu_custom_call.1} parent=5 // pred_check
      _
    $region38: #{tpu_custom_call.1} parent=5 // pred_check_branch
      %192 = sbr.rel (%p189) target = $region40
    $region39: #{tpu_custom_call.1} parent=5 // pred_region
      %s193 = ssub.s32 %s11, 1
      %s194 = smul.u32 4, %s16
      %p195 = scmp.lt.s32.totalorder %s194, 7
      %s196 = scalar_select %p195, %s194, 7
      %s197 = smul.addr %s196, 8
      %s198 = scalar_lea.vmem %s0, %s197
      %p199 = pneg %p37
      %p200 = pneg %p34
      %p201 = pneg %p58
      %p202 = pneg %p55
      %p203 = pneg %p79
      %p204 = pneg %p76
      %p205 = pneg %p100
      %p206 = pneg %p97
      %p207 = pneg %p121
      %p208 = pneg %p118
      %p209 = pneg %p147
      %p210 = pneg %p144
      %s211 = smul.u32 4, %s16
      %p212 = scmp.lt.s32.totalorder %s211, 7
      %s213 = scalar_select %p212, %s211, 7
      %s214 = smul.addr %s213, 8
      %s215 = scalar_lea.vmem %s5, %s214
      %s216 = smul.u32 4, %s16
      %p217 = scmp.lt.s32.totalorder %s216, 7
      %s218 = scalar_select %p217, %s216, 7
      %s219 = smul.addr %s218, 8
      %s220 = scalar_lea.vmem %s0, %s219
      %s221 = smul.u32 4, %s16
      %s222 = smul.u32 4, %s16
      %p223 = scmp.lt.s32.totalorder %s222, 7
      %s224 = scalar_select %p223, %s222, 7
      %s225 = smul.addr %s224, 8
      %s226 = scalar_lea.vmem %s5, %s225
      %s227 = smul.u32 4, %s16
      %v229 = vld [vmem:[%s220] sm:$0xff]
      %v230 = vld [vmem:[%s220 + $0x8] sm:$0xff]
      %v231 = vld [vmem:[%s220 + $0x10] sm:$0xff]
      %v232 = vld [vmem:[%s220 + $0x18] sm:$0xff]
      %v233 = vpack.c.bf16 %v230, %v229
      %v234 = vpack.c.bf16 %v232, %v231
      %v235 = vunpack.c.l.bf16 %v233
      %v236 = vunpack.c.h.bf16 %v233
      %v237 = vunpack.c.l.bf16 %v234
      %v238 = vunpack.c.h.bf16 %v234
      %v239 = vmul.f32 %v235, %v235
      %v240 = vmul.f32 %v236, %v236
      %v241 = vmul.f32 %v237, %v237
      %v242 = vmul.f32 %v238, %v238
      %vm243 = vcmask 130048
      %v244 = vsel %vm243, %v239, 0.0
      %245 = vadd.xlane.f32.xlu0 %v244
      %v246 = vpop.xlane.xlu0 %245
      %v247 = vsel %vm243, %v240, 0.0
      %248 = vadd.xlane.f32.xlu0 %v247
      %v249 = vpop.xlane.xlu0 %248
      %v250 = vsel %vm243, %v241, 0.0
      %251 = vadd.xlane.f32.xlu0 %v250
      %v252 = vpop.xlane.xlu0 %251
      %v253 = vsel %vm243, %v242, 0.0
      %254 = vadd.xlane.f32.xlu0 %v253
      %v255 = vpop.xlane.xlu0 %254
      %v256 = vld [vmem:[%s1] sm:$0xf]
      %v257 = vld [vmem:[%s1 + $0x4] sm:$0xf]
      %v260 = vunpack.c.l.b16 %v256
      %v261 = vunpack.c.l.b16 %v257
      %v262 = vpack.c.b16 %v261, %v260
      %v265 = vsel %vm243, %v233, 0
      %v268 = vsel %vm243, %v234, 0
      %270 = vmatprep.subr.bf16.mxu0 0
      %271 = vmatpush1.bf16.msra.mxu0 0
      %272 = vmatprep.subr.bf16.mxu0 0
      %273 = vmatpush1.bf16.msra.mxu0 0
      %274 = vmatprep.subr.bf16.mxu0 0
      %275 = vmatpush1.bf16.msra.mxu0 0
      %276 = vmatprep.subr.bf16.mxu0 0
      %277 = vmatpush1.bf16.msra.mxu0 0
      %278 = vmatprep.subr.bf16.mxu0 0
      %279 = vmatpush1.bf16.msra.mxu0 0
      %280 = vmatprep.subr.bf16.mxu0 0
      %281 = vmatpush1.bf16.msra.mxu0 0
      %282 = vmatprep.subr.bf16.mxu0 0
      %283 = vmatpush1.bf16.msra.mxu0 0
      %284 = vmatprep.subr.bf16.mxu0 0
      %285 = vmatpush1.bf16.msra.mxu0 %v262
      %286 = vmatprep.subr.bf16.mxu0 0
      %287 = vmatpush2.bf16.msra.mxu0 0
      %288 = vmatprep.subr.bf16.mxu0 0
      %289 = vmatpush2.bf16.msra.mxu0 0
      %290 = vmatprep.subr.bf16.mxu0 0
      %291 = vmatpush2.bf16.msra.mxu0 0
      %292 = vmatprep.subr.bf16.mxu0 0
      %293 = vmatpush2.bf16.msra.mxu0 0
      %294 = vmatprep.subr.bf16.mxu0 0
      %295 = vmatpush2.bf16.msra.mxu0 0
      %296 = vmatprep.subr.bf16.mxu0 0
      %297 = vmatpush2.bf16.msra.mxu0 0
      %298 = vmatprep.subr.bf16.mxu0 0
      %299 = vmatpush2.bf16.msra.mxu0 0
      %300 = vmatprep.subr.bf16.mxu0 0
      %301 = vmatpush2.bf16.msra.mxu0 0
      %302 = vmatprep.mubr.bf16.mxu0 0
      %303 = vmatmul.mubr.bf16.gmra.mxu0 %v265
      %v304 = vpop.f32.mrf.mxu0
      %v305 = vadd.f32 0.0, %v304
      %v306 = vpop.f32.mrf.mxu0
      %v307 = vpop.f32.mrf.mxu0
      %v308 = vadd.f32 0.0, %v307
      %v309 = vpop.f32.mrf.mxu0
      %310 = vmatprep.mubr.bf16.mxu0 0
      %311 = vmatmul.mubr.bf16.gmra.mxu0 %v268
      %v312 = vpop.f32.mrf.mxu0
      %v313 = vadd.f32 0.0, %v312
      %v314 = vpop.f32.mrf.mxu0
      %v315 = vpop.f32.mrf.mxu0
      %v316 = vadd.f32 0.0, %v315
      %v317 = vpop.f32.mrf.mxu0
      %318 = vdwg.mxu0
      %v319 = vld [vmem:[%s2] sm:$0x1]
      %v321 = vlaneseq
      %v322 = vshrl.u32 %v321, 7
      %v323 = vsub.s32 0, %v322
      %v324 = vrot.slane %v319, %v323
      %v326 = vadd.f32 %v246, %v324
      %v327 = vadd.f32 %v249, %v324
      %v328 = vadd.f32 %v252, %v324
      %v329 = vadd.f32 %v255, %v324
      %v330 = vadd.f32 %v326, %v305
      %v331 = vadd.f32 %v327, %v308
      %v332 = vadd.f32 %v328, %v313
      %v333 = vadd.f32 %v329, %v316
      %v334 = vmax.f32 %v330, 0.0
      %v335 = vmax.f32 %v331, 0.0
      %v336 = vmax.f32 %v332, 0.0
      %v337 = vmax.f32 %v333, 0.0
      %v338 = vrsqrt.pop %v334
      %v339 = vmul.f32 %v334, %v338
      %vm340 = vcmp.eq.f32.partialorder %v334, inf
      %v341 = vsel %vm340, %v334, %v339
      %vm342 = vcmp.eq.f32.partialorder %v334, 0.0
      %v343 = vand.u32 %v334, 2147483648
      %v344 = vsel %vm342, %v343, %v341
      %v345 = vrsqrt.pop %v335
      %v346 = vmul.f32 %v335, %v345
      %vm347 = vcmp.eq.f32.partialorder %v335, inf
      %v348 = vsel %vm347, %v335, %v346
      %vm349 = vcmp.eq.f32.partialorder %v335, 0.0
      %v350 = vand.u32 %v335, 2147483648
      %v351 = vsel %vm349, %v350, %v348
      %v352 = vrsqrt.pop %v336
      %v353 = vmul.f32 %v336, %v352
      %vm354 = vcmp.eq.f32.partialorder %v336, inf
      %v355 = vsel %vm354, %v336, %v353
      %vm356 = vcmp.eq.f32.partialorder %v336, 0.0
      %v357 = vand.u32 %v336, 2147483648
      %v358 = vsel %vm356, %v357, %v355
      %v359 = vrsqrt.pop %v337
      %v360 = vmul.f32 %v337, %v359
      %vm361 = vcmp.eq.f32.partialorder %v337, inf
      %v362 = vsel %vm361, %v337, %v360
      %vm363 = vcmp.eq.f32.partialorder %v337, 0.0
      %v364 = vand.u32 %v337, 2147483648
      %v365 = vsel %vm363, %v364, %v362
      %v366 = vpack.c.bf16 %v351, %v344
      %v367 = vpack.c.bf16 %v365, %v358
      %v368 = vld [vmem:[%s3] sm:$0xf]
      %v369 = vld [vmem:[%s3 + $0x4] sm:$0xf]
      %v370 = vld [vmem:[%s3 + $0x8] sm:$0xf]
      %v371 = vld [vmem:[%s3 + $0xc] sm:$0xf]
      %v372 = vld [vmem:[%s3 + $0x10] sm:$0xf]
      %v373 = vld [vmem:[%s3 + $0x14] sm:$0xf]
      %v374 = vld [vmem:[%s3 + $0x18] sm:$0xf]
      %v375 = vld [vmem:[%s3 + $0x1c] sm:$0xf]
      %v376 = vld [vmem:[%s3 + $0x20] sm:$0xf]
      %v377 = vld [vmem:[%s3 + $0x24] sm:$0xf]
      %v378 = vld [vmem:[%s3 + $0x28] sm:$0xf]
      %v379 = vld [vmem:[%s3 + $0x2c] sm:$0xf]
      %v380 = vld [vmem:[%s3 + $0x30] sm:$0xf]
      %v381 = vld [vmem:[%s3 + $0x34] sm:$0xf]
      %v382 = vld [vmem:[%s3 + $0x38] sm:$0xf]
      %v383 = vld [vmem:[%s3 + $0x3c] sm:$0xf]
      %v384 = vld [vmem:[%s4] sm:$0x1]
      %v386 = vlaneseq
      %v387 = vshrl.u32 %v386, 7
      %v388 = vsub.s32 0, %v387
      %v389 = vrot.slane %v384, %v388
      %v407 = vunpack.c.l.b16 %v368
      %v408 = vunpack.c.l.b16 %v369
      %v409 = vunpack.c.l.b16 %v370
      %v410 = vunpack.c.l.b16 %v371
      %v411 = vunpack.c.l.b16 %v372
      %v412 = vunpack.c.l.b16 %v373
      %v413 = vunpack.c.l.b16 %v374
      %v414 = vunpack.c.l.b16 %v375
      %v415 = vunpack.c.l.b16 %v376
      %v416 = vunpack.c.l.b16 %v377
      %v417 = vunpack.c.l.b16 %v378
      %v418 = vunpack.c.l.b16 %v379
      %v419 = vunpack.c.l.b16 %v380
      %v420 = vunpack.c.l.b16 %v381
      %v421 = vunpack.c.l.b16 %v382
      %v422 = vunpack.c.l.b16 %v383
      %v423 = vpack.c.b16 %v408, %v407
      %v424 = vpack.c.b16 %v410, %v409
      %v425 = vpack.c.b16 %v412, %v411
      %v426 = vpack.c.b16 %v414, %v413
      %v427 = vpack.c.b16 %v416, %v415
      %v428 = vpack.c.b16 %v418, %v417
      %v429 = vpack.c.b16 %v420, %v419
      %v430 = vpack.c.b16 %v422, %v421
      %439 = vmatprep.subr.bf16.mxu0 0
      %440 = vmatpush1.bf16.msra.mxu0 %v430
      %441 = vmatprep.subr.bf16.mxu0 0
      %442 = vmatpush1.bf16.msra.mxu0 %v429
      %443 = vmatprep.subr.bf16.mxu0 0
      %444 = vmatpush1.bf16.msra.mxu0 %v428
      %445 = vmatprep.subr.bf16.mxu0 0
      %446 = vmatpush1.bf16.msra.mxu0 %v427
      %447 = vmatprep.subr.bf16.mxu0 0
      %448 = vmatpush1.bf16.msra.mxu0 %v426
      %449 = vmatprep.subr.bf16.mxu0 0
      %450 = vmatpush1.bf16.msra.mxu0 %v425
      %451 = vmatprep.subr.bf16.mxu0 0
      %452 = vmatpush1.bf16.msra.mxu0 %v424
      %453 = vmatprep.subr.bf16.mxu0 0
      %454 = vmatpush1.bf16.msra.mxu0 %v423
      %455 = vmatprep.subr.bf16.mxu0 0
      %456 = vmatpush2.bf16.msra.mxu0 0
      %457 = vmatprep.subr.bf16.mxu0 0
      %458 = vmatpush2.bf16.msra.mxu0 0
      %459 = vmatprep.subr.bf16.mxu0 0
      %460 = vmatpush2.bf16.msra.mxu0 0
      %461 = vmatprep.subr.bf16.mxu0 0
      %462 = vmatpush2.bf16.msra.mxu0 0
      %463 = vmatprep.subr.bf16.mxu0 0
      %464 = vmatpush2.bf16.msra.mxu0 0
      %465 = vmatprep.subr.bf16.mxu0 0
      %466 = vmatpush2.bf16.msra.mxu0 0
      %467 = vmatprep.subr.bf16.mxu0 0
      %468 = vmatpush2.bf16.msra.mxu0 0
      %469 = vmatprep.subr.bf16.mxu0 0
      %470 = vmatpush2.bf16.msra.mxu0 0
      %471 = vmatprep.mubr.bf16.mxu0 0
      %472 = vmatmul.mubr.bf16.gmra.mxu0 %v366
      %v473 = vpop.f32.mrf.mxu0
      %v474 = vadd.f32 %v389, %v473
      %v475 = vpop.f32.mrf.mxu0
      %v476 = vpop.f32.mrf.mxu0
      %v477 = vadd.f32 %v389, %v476
      %v478 = vpop.f32.mrf.mxu0
      %479 = vmatprep.mubr.bf16.mxu0 0
      %480 = vmatmul.mubr.bf16.gmra.mxu0 %v367
      %v481 = vpop.f32.mrf.mxu0
      %v482 = vadd.f32 %v389, %v481
      %v483 = vpop.f32.mrf.mxu0
      %v484 = vpop.f32.mrf.mxu0
      %v485 = vadd.f32 %v389, %v484
      %v486 = vpop.f32.mrf.mxu0
      %487 = vdwg.mxu0
      %vm488 = vcmask 64512
      %489 = vst.msk [vmem:[%s226] sm:$0xff] %vm488, %v474
      %490 = vst.msk [vmem:[%s226 + $0x8] sm:$0xff] %vm488, %v477
      %491 = vst.msk [vmem:[%s226 + $0x10] sm:$0xff] %vm488, %v482
      %492 = vst.msk [vmem:[%s226 + $0x18] sm:$0xff] %vm488, %v485
      %s493 = smul.u32 4, %s16
      %p494 = scmp.lt.s32.totalorder %s493, 7
      %s495 = scalar_select %p494, %s493, 7
      %s496 = smul.addr %s495, 8
      %s497 = scalar_lea.vmem %s5, %s496
      // Predicated region
      $region41: #{tpu_custom_call.1} parent=39 // pred_check
        %p498 = pneg %p144
      $region42: #{tpu_custom_call.1} parent=39 // pred_check_branch
        %500 = sbr.rel (%p498) target = $region44
      $region43: #{tpu_custom_call.1} parent=39 // pred_region
        %s501 = smul.u32 4, %s16
      $region44: #{tpu_custom_call.1} parent=39 // pred_fallthru
        _
    $region40: #{tpu_custom_call.1} parent=5 // pred_fallthru
      _
    %p502 = scmp.le.s32.totalorder 2, %s11
    // Predicated region
    $region45: #{tpu_custom_call.1} parent=5 // pred_check
      %p503 = pneg %p502
    $region46: #{tpu_custom_call.1} parent=5 // pred_check_branch
      %505 = sbr.rel (%p503) target = $region48
    $region47: #{tpu_custom_call.1} parent=5 // pred_region
      %s506 = ssub.s32 %s11, 2
      // Predicated region
      $region49: #{tpu_custom_call.1} parent=47 // pred_check
        %p507 = pneg %p150
      $region50: #{tpu_custom_call.1} parent=47 // pred_check_branch
        %509 = sbr.rel (%p507) target = $region52
      $region51: #{tpu_custom_call.1} parent=47 // pred_region
        %s510 = smul.u32 4, %s17
        %p511 = scmp.lt.s32.totalorder %s510, 7
        %s512 = scalar_select %p511, %s510, 7
        %s513 = smul.addr %s512, 8
        %s514 = scalar_lea.vmem %s5, %s513
      $region52: #{tpu_custom_call.1} parent=47 // pred_fallthru
        _
    $region48: #{tpu_custom_call.1} parent=5 // pred_fallthru
      _
  $region6: #{tpu_custom_call.1} parent=0 // loop_footer
    %s15 = sadd.s32 1, %s11
  $region7: #{tpu_custom_call.1} parent=0 // loop_footer_branch
    %10 = sbr.rel target = $region3
  $region8: #{tpu_custom_call.1} parent=0 // loop_exit
    _

</llo_original>
